<compile_context>
chip_gen: v6e
topology: v6e:2x2x1
jax: 0.10.0
libtpu: 0.0.40
codegen_flags: <defaults>
</compile_context>

<pallas_src>
import jax
import jax.numpy as jnp
from jax.experimental import pallas as pl
from jax.experimental.pallas import tpu as pltpu

C = 24                      # channels (fixed by the forward's reshape)
L = 32                      # pooled-over length (fixed by the forward's reshape)
D = C * L                   # 768 = 6 * 128 lanes
REDUCTION = 16
C_RED = C // REDUCTION      # = 1
RED_PAD = 8                 # zero-padded reduced dim (sublane friendly)


def _round_up(x, m):
    return (x + m - 1) // m * m


def se_kernel(x_ref, m1_ref, m2_ref, o_ref):
    # x_ref: (TB, 768) lane-dense tile of flattened (batch, channel*length) rows.
    x = x_ref[...]
    xf = x.astype(jnp.float32)                       # single cast (no-op for f32)
    # squeeze + Linear(24 -> 1, no bias) fused: (TB,768) @ (768,8)
    h = jnp.dot(xf, m1_ref[...], preferred_element_type=jnp.float32)
    h = jnp.maximum(h, 0.0)                          # ReLU
    # Linear(1 -> 24, no bias) + channel->lane broadcast fused: (TB,8) @ (8,768)
    s = jax.nn.sigmoid(jnp.dot(h, m2_ref[...], preferred_element_type=jnp.float32))
    # scale (lane-dense, unmasked store)
    o_ref[...] = (xf * s).astype(o_ref.dtype)


def se_layer(x, w1, w2, *, tile_rows=1024):
    """SELayer forward.

    x : any shape with total elements divisible by 24*32.
    w1: (C, C_RED)  = first Linear weight, transposed  (PyTorch W1 is (1, 24)).
    w2: (C_RED, C)  = second Linear weight, transposed (PyTorch W2 is (24, 1)).
    Returns a tensor of shape (-1, 24, 32), matching the PyTorch forward.
    """
    x2 = x.reshape(-1, D)                            # contiguous, free
    b = x2.shape[0]

    # tile size: large for throughput, shrunk for tiny demo batches
    tb = min(tile_rows, _round_up(b, 8))
    b_pad = _round_up(b, tb)
    if b_pad != b:
        x2 = jnp.pad(x2, ((0, b_pad - b), (0, 0)))   # zero rows, sliced off below

    # Fold pooling + channel-broadcast into the weights (built in f32).
    pool = jnp.repeat(jnp.eye(C, dtype=jnp.float32), L, axis=0) / L   # (768, C)
    expand = jnp.repeat(jnp.eye(C, dtype=jnp.float32), L, axis=1)     # (C, 768)
    m1 = pool @ w1.astype(jnp.float32)               # (768, C_RED)
    m2 = w2.astype(jnp.float32) @ expand             # (C_RED, 768)
    m1 = jnp.pad(m1, ((0, 0), (0, RED_PAD - C_RED))) # (768, 8)  zero-padded
    m2 = jnp.pad(m2, ((0, RED_PAD - C_RED), (0, 0))) # (8, 768)  zero-padded

    out2 = pl.pallas_call(
        se_kernel,
        out_shape=jax.ShapeDtypeStruct((b_pad, D), x2.dtype),
        grid_spec=pltpu.PrefetchScalarGridSpec(
            num_scalar_prefetch=0,
            grid=(b_pad // tb,),
            in_specs=[
                pl.BlockSpec((tb, D), lambda i: (i, 0)),
                pl.BlockSpec((D, RED_PAD), lambda i: (0, 0)),
                pl.BlockSpec((RED_PAD, D), lambda i: (0, 0)),
            ],
            out_specs=pl.BlockSpec((tb, D), lambda i: (i, 0)),
        ),
        compiler_params=pltpu.CompilerParams(
            dimension_semantics=("parallel",)),
    )(x2, m1, m2)

    return out2[:b].reshape(-1, C, L)


if __name__ == "__main__":
    key = jax.random.PRNGKey(0)
    kx, k1, k2 = jax.random.split(key, 3)

    # deterministic synthetic parameters
    # (PyTorch: Linear(24,1) weight (1,24), Linear(1,24) weight (24,1))
    w1 = jax.random.normal(k1, (C, C_RED), dtype=jnp.float32) * 0.2   # = W1.T
    w2 = jax.random.normal(k2, (C_RED, C), dtype=jnp.float32) * 0.2   # = W2.T

    # small input consistent with the forward's reshape(-1, 24, 32)
    x = jax.random.normal(kx, (16, C, L), dtype=jnp.float32)

    out = se_layer(x, w1, w2)
    jax.block_until_ready(out)

    # pure-JAX reference of the same math (un-folded weights)
    y_ref = jnp.mean(x, axis=-1)
    s_ref = jax.nn.sigmoid(jnp.maximum(y_ref @ w1, 0.0) @ w2)
    ref = x * s_ref[:, :, None]
    assert out.shape == ref.shape
    assert jnp.allclose(out, ref, atol=1e-5, rtol=1e-5)

    print("KERNEL_OK")
</pallas_src>

<mosaic_0001>
module attributes {stable_mosaic.version = 11 : i64} {
  func.func @se_kernel(%arg0: i32, %arg1: memref<16x768xf32, #tpu.memory_space<vmem>>, %arg2: memref<768x8xf32, #tpu.memory_space<vmem>>, %arg3: memref<8x768xf32, #tpu.memory_space<vmem>>, %arg4: memref<16x768xf32, #tpu.memory_space<vmem>>) attributes {dimension_semantics = [#tpu.dimension_semantics<parallel>], iteration_bounds = array<i64: 1>, scalar_prefetch = 0 : i64, scratch_operands = 0 : i64, tpu.core_type = #tpu.core_type<tc>, window_params = [{transform_indices = @transform_0, window_bounds = array<i64: 16, 768>}, {pipeline_mode = #tpu.pipeline_mode<synchronous>, transform_indices = @transform_1, window_bounds = array<i64: 768, 8>}, {pipeline_mode = #tpu.pipeline_mode<synchronous>, transform_indices = @transform_2, window_bounds = array<i64: 8, 768>}, {transform_indices = @transform_3, window_bounds = array<i64: 16, 768>}]} {
    %c0 = arith.constant 0 : index
    %c0_0 = arith.constant 0 : index
    %0 = vector.load %arg1[%c0, %c0_0] : memref<16x768xf32, #tpu.memory_space<vmem>>, vector<16x768xf32>
    %c0_1 = arith.constant 0 : index
    %c0_2 = arith.constant 0 : index
    %1 = vector.load %arg2[%c0_1, %c0_2] : memref<768x8xf32, #tpu.memory_space<vmem>>, vector<768x8xf32>
    %cst = arith.constant dense<0.000000e+00> : vector<16x8xf32>
    %2 = tpu.matmul %0, %1, %cst {dimension_numbers = #tpu.dot_dimension_numbers<[1], [0], [0], [1], [0, 0, 1, 1], [], []>} : vector<16x768xf32>, vector<768x8xf32>, vector<16x8xf32> -> vector<16x8xf32>
    %cst_3 = arith.constant 0.000000e+00 : f32
    %3 = vector.broadcast %cst_3 : f32 to vector<16x8xf32>
    %4 = arith.maximumf %2, %3 : vector<16x8xf32>
    %c0_4 = arith.constant 0 : index
    %c0_5 = arith.constant 0 : index
    %5 = vector.load %arg3[%c0_4, %c0_5] : memref<8x768xf32, #tpu.memory_space<vmem>>, vector<8x768xf32>
    %cst_6 = arith.constant dense<0.000000e+00> : vector<16x768xf32>
    %6 = tpu.matmul %4, %5, %cst_6 {dimension_numbers = #tpu.dot_dimension_numbers<[1], [0], [0], [1], [0, 0, 1, 1], [], []>} : vector<16x8xf32>, vector<8x768xf32>, vector<16x768xf32> -> vector<16x768xf32>
    %7 = arith.negf %6 : vector<16x768xf32>
    %8 = math.exp %7 : vector<16x768xf32>
    %cst_7 = arith.constant 1.000000e+00 : f32
    %9 = vector.broadcast %cst_7 : f32 to vector<16x768xf32>
    %10 = arith.addf %9, %8 : vector<16x768xf32>
    %11 = arith.divf %9, %10 : vector<16x768xf32>
    %12 = arith.mulf %0, %11 : vector<16x768xf32>
    %c0_8 = arith.constant 0 : index
    %c0_9 = arith.constant 0 : index
    %13 = vector.load %arg4[%c0_8, %c0_9] : memref<16x768xf32, #tpu.memory_space<vmem>>, vector<16x768xf32>
    tpu.vector_store %arg4[%c0_8, %c0_9], %12 {strides = array<i32>} : memref<16x768xf32, #tpu.memory_space<vmem>>, vector<16x768xf32>,
    return
  }
  func.func @transform_0(%arg0: i32) -> (i32, i32) {
    %c0_i32 = arith.constant 0 : i32
    %c0_i32_0 = arith.constant 0 : i32
    return %arg0, %c0_i32 : i32, i32
  }
  func.func @transform_1(%arg0: i32) -> (i32, i32) {
    %c0_i32 = arith.constant 0 : i32
    %c0_i32_0 = arith.constant 0 : i32
    %c0_i32_1 = arith.constant 0 : i32
    return %c0_i32, %c0_i32_0 : i32, i32
  }
  func.func @transform_2(%arg0: i32) -> (i32, i32) {
    %c0_i32 = arith.constant 0 : i32
    %c0_i32_0 = arith.constant 0 : i32
    %c0_i32_1 = arith.constant 0 : i32
    return %c0_i32, %c0_i32_0 : i32, i32
  }
  func.func @transform_3(%arg0: i32) -> (i32, i32) {
    %c0_i32 = arith.constant 0 : i32
    %c0_i32_0 = arith.constant 0 : i32
    return %arg0, %c0_i32 : i32, i32
  }
}

</mosaic_0001>

<llo_original>
// kernel: tpu_custom_call.1
$region0: #{tpu_custom_call.1}
  #allocation0 [shape = 'u32[]', space=smem, size = 0x4, offset = 0x4, fixed_abs, tag = 'smem constant byte address 0x4 - core index']
  #allocation1 [shape = 'u32[144,128]{1,0:T(1,128)}', space=vmem, size = 0x12000, scoped, tag = 'internal scratch']
  %s0 = inlined_call_operand.vmem [shape: f32[16,768], index: 0, kind: input, shape index: {}]
  %s1 = inlined_call_operand.vmem [shape: f32[768,8], index: 1, kind: input, shape index: {}]
  %s2 = inlined_call_operand.vmem [shape: f32[8,768], index: 2, kind: input, shape index: {}]
  %s3 = inlined_call_operand.hbm [shape: f32[16,768], index: 3, kind: output, shape index: {}]
  %s4 = sld [smem:[#allocation0]]
  $region22: #{tpu_custom_call.1} parent=0
    _
  %s6 = ssub.s32 1, %s4
  %s7 = scalar_select 0, %s6, %s4
  $region1: #{tpu_custom_call.1} parent=0
    #allocation2 [shape = 'u8[49152]{0}', space=vmem, size = 0xc000, scoped, tag = 'output window, operand 0, single buffered']
    #allocation3 [shape = 's32[1]{0}', space=sflag, size = 0x4, scoped, tag = 'scoped memory for tpu_custom_call.1']
    %8 = vsyncpa [#allocation3], 0
    // Predicated region
    $region2: #{tpu_custom_call.1} parent=1 // pred_check
      _
    $region3: #{tpu_custom_call.1} parent=1 // pred_check_branch
      %10 = sbr.rel (0) target = $region5
    $region4: #{tpu_custom_call.1} parent=1 // pred_region
      _
    $region5: #{tpu_custom_call.1} parent=1 // pred_fallthru
      _
    // Predicated region
    $region6: #{tpu_custom_call.1} parent=1 // pred_check
      _
    $region7: #{tpu_custom_call.1} parent=1 // pred_check_branch
      %12 = sbr.rel (0) target = $region9
    $region8: #{tpu_custom_call.1} parent=1 // pred_region
      _
    $region9: #{tpu_custom_call.1} parent=1 // pred_fallthru
      _
    // Predicated region
    $region10: #{tpu_custom_call.1} parent=1 // pred_check
      _
    $region11: #{tpu_custom_call.1} parent=1 // pred_check_branch
      %14 = sbr.rel (0) target = $region13
    $region12: #{tpu_custom_call.1} parent=1 // pred_region
      _
    $region13: #{tpu_custom_call.1} parent=1 // pred_fallthru
      _
    %v15 = vld [vmem:[%s0] sm:$0xff]
    %v16 = vld [vmem:[%s0 + $0x8] sm:$0xff]
    %v17 = vld [vmem:[%s0 + $0x10] sm:$0xff]
    %v18 = vld [vmem:[%s0 + $0x18] sm:$0xff]
    %v19 = vld [vmem:[%s0 + $0x20] sm:$0xff]
    %v20 = vld [vmem:[%s0 + $0x28] sm:$0xff]
    %v21 = vld [vmem:[%s0 + $0x30] sm:$0xff]
    %v22 = vld [vmem:[%s0 + $0x38] sm:$0xff]
    %v23 = vld [vmem:[%s0 + $0x40] sm:$0xff]
    %v24 = vld [vmem:[%s0 + $0x48] sm:$0xff]
    %v25 = vld [vmem:[%s0 + $0x50] sm:$0xff]
    %v26 = vld [vmem:[%s0 + $0x58] sm:$0xff]
    %v27 = vld [vmem:[%s1] sm:$0xff]
    %v28 = vld [vmem:[%s1 + $0x8] sm:$0xff]
    %v29 = vld [vmem:[%s1 + $0x10] sm:$0xff]
    %v30 = vld [vmem:[%s1 + $0x18] sm:$0xff]
    %v31 = vld [vmem:[%s1 + $0x20] sm:$0xff]
    %v32 = vld [vmem:[%s1 + $0x28] sm:$0xff]
    %v33 = vld [vmem:[%s1 + $0x30] sm:$0xff]
    %v34 = vld [vmem:[%s1 + $0x38] sm:$0xff]
    %v35 = vld [vmem:[%s1 + $0x40] sm:$0xff]
    %v36 = vld [vmem:[%s1 + $0x48] sm:$0xff]
    %v37 = vld [vmem:[%s1 + $0x50] sm:$0xff]
    %v38 = vld [vmem:[%s1 + $0x58] sm:$0xff]
    %v39 = vld [vmem:[%s1 + $0x60] sm:$0xff]
    %v40 = vld [vmem:[%s1 + $0x68] sm:$0xff]
    %v41 = vld [vmem:[%s1 + $0x70] sm:$0xff]
    %v42 = vld [vmem:[%s1 + $0x78] sm:$0xff]
    %v43 = vld [vmem:[%s1 + $0x80] sm:$0xff]
    %v44 = vld [vmem:[%s1 + $0x88] sm:$0xff]
    %v45 = vld [vmem:[%s1 + $0x90] sm:$0xff]
    %v46 = vld [vmem:[%s1 + $0x98] sm:$0xff]
    %v47 = vld [vmem:[%s1 + $0xa0] sm:$0xff]
    %v48 = vld [vmem:[%s1 + $0xa8] sm:$0xff]
    %v49 = vld [vmem:[%s1 + $0xb0] sm:$0xff]
    %v50 = vld [vmem:[%s1 + $0xb8] sm:$0xff]
    %v51 = vld [vmem:[%s1 + $0xc0] sm:$0xff]
    %v52 = vld [vmem:[%s1 + $0xc8] sm:$0xff]
    %v53 = vld [vmem:[%s1 + $0xd0] sm:$0xff]
    %v54 = vld [vmem:[%s1 + $0xd8] sm:$0xff]
    %v55 = vld [vmem:[%s1 + $0xe0] sm:$0xff]
    %v56 = vld [vmem:[%s1 + $0xe8] sm:$0xff]
    %v57 = vld [vmem:[%s1 + $0xf0] sm:$0xff]
    %v58 = vld [vmem:[%s1 + $0xf8] sm:$0xff]
    %v59 = vld [vmem:[%s1 + $0x100] sm:$0xff]
    %v60 = vld [vmem:[%s1 + $0x108] sm:$0xff]
    %v61 = vld [vmem:[%s1 + $0x110] sm:$0xff]
    %v62 = vld [vmem:[%s1 + $0x118] sm:$0xff]
    %v63 = vld [vmem:[%s1 + $0x120] sm:$0xff]
    %v64 = vld [vmem:[%s1 + $0x128] sm:$0xff]
    %v65 = vld [vmem:[%s1 + $0x130] sm:$0xff]
    %v66 = vld [vmem:[%s1 + $0x138] sm:$0xff]
    %v67 = vld [vmem:[%s1 + $0x140] sm:$0xff]
    %v68 = vld [vmem:[%s1 + $0x148] sm:$0xff]
    %v69 = vld [vmem:[%s1 + $0x150] sm:$0xff]
    %v70 = vld [vmem:[%s1 + $0x158] sm:$0xff]
    %v71 = vld [vmem:[%s1 + $0x160] sm:$0xff]
    %v72 = vld [vmem:[%s1 + $0x168] sm:$0xff]
    %v73 = vld [vmem:[%s1 + $0x170] sm:$0xff]
    %v74 = vld [vmem:[%s1 + $0x178] sm:$0xff]
    %v75 = vld [vmem:[%s1 + $0x180] sm:$0xff]
    %v76 = vld [vmem:[%s1 + $0x188] sm:$0xff]
    %v77 = vld [vmem:[%s1 + $0x190] sm:$0xff]
    %v78 = vld [vmem:[%s1 + $0x198] sm:$0xff]
    %v79 = vld [vmem:[%s1 + $0x1a0] sm:$0xff]
    %v80 = vld [vmem:[%s1 + $0x1a8] sm:$0xff]
    %v81 = vld [vmem:[%s1 + $0x1b0] sm:$0xff]
    %v82 = vld [vmem:[%s1 + $0x1b8] sm:$0xff]
    %v83 = vld [vmem:[%s1 + $0x1c0] sm:$0xff]
    %v84 = vld [vmem:[%s1 + $0x1c8] sm:$0xff]
    %v85 = vld [vmem:[%s1 + $0x1d0] sm:$0xff]
    %v86 = vld [vmem:[%s1 + $0x1d8] sm:$0xff]
    %v87 = vld [vmem:[%s1 + $0x1e0] sm:$0xff]
    %v88 = vld [vmem:[%s1 + $0x1e8] sm:$0xff]
    %v89 = vld [vmem:[%s1 + $0x1f0] sm:$0xff]
    %v90 = vld [vmem:[%s1 + $0x1f8] sm:$0xff]
    %v91 = vld [vmem:[%s1 + $0x200] sm:$0xff]
    %v92 = vld [vmem:[%s1 + $0x208] sm:$0xff]
    %v93 = vld [vmem:[%s1 + $0x210] sm:$0xff]
    %v94 = vld [vmem:[%s1 + $0x218] sm:$0xff]
    %v95 = vld [vmem:[%s1 + $0x220] sm:$0xff]
    %v96 = vld [vmem:[%s1 + $0x228] sm:$0xff]
    %v97 = vld [vmem:[%s1 + $0x230] sm:$0xff]
    %v98 = vld [vmem:[%s1 + $0x238] sm:$0xff]
    %v99 = vld [vmem:[%s1 + $0x240] sm:$0xff]
    %v100 = vld [vmem:[%s1 + $0x248] sm:$0xff]
    %v101 = vld [vmem:[%s1 + $0x250] sm:$0xff]
    %v102 = vld [vmem:[%s1 + $0x258] sm:$0xff]
    %v103 = vld [vmem:[%s1 + $0x260] sm:$0xff]
    %v104 = vld [vmem:[%s1 + $0x268] sm:$0xff]
    %v105 = vld [vmem:[%s1 + $0x270] sm:$0xff]
    %v106 = vld [vmem:[%s1 + $0x278] sm:$0xff]
    %v107 = vld [vmem:[%s1 + $0x280] sm:$0xff]
    %v108 = vld [vmem:[%s1 + $0x288] sm:$0xff]
    %v109 = vld [vmem:[%s1 + $0x290] sm:$0xff]
    %v110 = vld [vmem:[%s1 + $0x298] sm:$0xff]
    %v111 = vld [vmem:[%s1 + $0x2a0] sm:$0xff]
    %v112 = vld [vmem:[%s1 + $0x2a8] sm:$0xff]
    %v113 = vld [vmem:[%s1 + $0x2b0] sm:$0xff]
    %v114 = vld [vmem:[%s1 + $0x2b8] sm:$0xff]
    %v115 = vld [vmem:[%s1 + $0x2c0] sm:$0xff]
    %v116 = vld [vmem:[%s1 + $0x2c8] sm:$0xff]
    %v117 = vld [vmem:[%s1 + $0x2d0] sm:$0xff]
    %v118 = vld [vmem:[%s1 + $0x2d8] sm:$0xff]
    %v119 = vld [vmem:[%s1 + $0x2e0] sm:$0xff]
    %v120 = vld [vmem:[%s1 + $0x2e8] sm:$0xff]
    %v121 = vld [vmem:[%s1 + $0x2f0] sm:$0xff]
    %v122 = vld [vmem:[%s1 + $0x2f8] sm:$0xff]
    %123 = vmatprep.subr.mxu0 0.0
    %124 = vmatpush1.msra.mxu0 %v42
    %125 = vmatprep.subr.mxu0 0.0
    %126 = vmatpush1.msra.mxu0 %v41
    %127 = vmatprep.subr.mxu0 0.0
    %128 = vmatpush1.msra.mxu0 %v40
    %129 = vmatprep.subr.mxu0 0.0
    %130 = vmatpush1.msra.mxu0 %v39
    %131 = vmatprep.subr.mxu0 0.0
    %132 = vmatpush1.msra.mxu0 %v38
    %133 = vmatprep.subr.mxu0 0.0
    %134 = vmatpush1.msra.mxu0 %v37
    %135 = vmatprep.subr.mxu0 0.0
    %136 = vmatpush1.msra.mxu0 %v36
    %137 = vmatprep.subr.mxu0 0.0
    %138 = vmatpush1.msra.mxu0 %v35
    %139 = vmatprep.subr.mxu0 0.0
    %140 = vmatpush1.msra.mxu0 %v34
    %141 = vmatprep.subr.mxu0 0.0
    %142 = vmatpush1.msra.mxu0 %v33
    %143 = vmatprep.subr.mxu0 0.0
    %144 = vmatpush1.msra.mxu0 %v32
    %145 = vmatprep.subr.mxu0 0.0
    %146 = vmatpush1.msra.mxu0 %v31
    %147 = vmatprep.subr.mxu0 0.0
    %148 = vmatpush1.msra.mxu0 %v30
    %149 = vmatprep.subr.mxu0 0.0
    %150 = vmatpush1.msra.mxu0 %v29
    %151 = vmatprep.subr.mxu0 0.0
    %152 = vmatpush1.msra.mxu0 %v28
    %153 = vmatprep.subr.mxu0 0.0
    %154 = vmatpush1.msra.mxu0 %v27
    %155 = vmatprep.subr.mxu0 0.0
    %156 = vmatpush2.msra.mxu0 %v58
    %157 = vmatprep.subr.mxu0 0.0
    %158 = vmatpush2.msra.mxu0 %v57
    %159 = vmatprep.subr.mxu0 0.0
    %160 = vmatpush2.msra.mxu0 %v56
    %161 = vmatprep.subr.mxu0 0.0
    %162 = vmatpush2.msra.mxu0 %v55
    %163 = vmatprep.subr.mxu0 0.0
    %164 = vmatpush2.msra.mxu0 %v54
    %165 = vmatprep.subr.mxu0 0.0
    %166 = vmatpush2.msra.mxu0 %v53
    %167 = vmatprep.subr.mxu0 0.0
    %168 = vmatpush2.msra.mxu0 %v52
    %169 = vmatprep.subr.mxu0 0.0
    %170 = vmatpush2.msra.mxu0 %v51
    %171 = vmatprep.subr.mxu0 0.0
    %172 = vmatpush2.msra.mxu0 %v50
    %173 = vmatprep.subr.mxu0 0.0
    %174 = vmatpush2.msra.mxu0 %v49
    %175 = vmatprep.subr.mxu0 0.0
    %176 = vmatpush2.msra.mxu0 %v48
    %177 = vmatprep.subr.mxu0 0.0
    %178 = vmatpush2.msra.mxu0 %v47
    %179 = vmatprep.subr.mxu0 0.0
    %180 = vmatpush2.msra.mxu0 %v46
    %181 = vmatprep.subr.mxu0 0.0
    %182 = vmatpush2.msra.mxu0 %v45
    %183 = vmatprep.subr.mxu0 0.0
    %184 = vmatpush2.msra.mxu0 %v44
    %185 = vmatprep.subr.mxu0 0.0
    %186 = vmatpush2.msra.mxu0 %v43
    %187 = vmatprep.mubr.f32.mxu0 %v16
    %188 = vmatmul.mubr.f32.gmra.mxu0 %v15
    %v189 = vpop.f32.mrf.mxu0
    %v190 = vadd.f32 0.0, %v189
    %v191 = vpop.f32.mrf.mxu0
    %192 = vmatprep.mubr.f32.mxu0 %v22
    %193 = vmatmul.mubr.f32.gmra.mxu0 %v21
    %v194 = vpop.f32.mrf.mxu0
    %v195 = vadd.f32 0.0, %v194
    %v196 = vpop.f32.mrf.mxu0
    %197 = vdwg.mxu0
    %198 = vmatprep.subr.mxu0 0.0
    %199 = vmatpush1.msra.mxu0 %v74
    %200 = vmatprep.subr.mxu0 0.0
    %201 = vmatpush1.msra.mxu0 %v73
    %202 = vmatprep.subr.mxu0 0.0
    %203 = vmatpush1.msra.mxu0 %v72
    %204 = vmatprep.subr.mxu0 0.0
    %205 = vmatpush1.msra.mxu0 %v71
    %206 = vmatprep.subr.mxu0 0.0
    %207 = vmatpush1.msra.mxu0 %v70
    %208 = vmatprep.subr.mxu0 0.0
    %209 = vmatpush1.msra.mxu0 %v69
    %210 = vmatprep.subr.mxu0 0.0
    %211 = vmatpush1.msra.mxu0 %v68
    %212 = vmatprep.subr.mxu0 0.0
    %213 = vmatpush1.msra.mxu0 %v67
    %214 = vmatprep.subr.mxu0 0.0
    %215 = vmatpush1.msra.mxu0 %v66
    %216 = vmatprep.subr.mxu0 0.0
    %217 = vmatpush1.msra.mxu0 %v65
    %218 = vmatprep.subr.mxu0 0.0
    %219 = vmatpush1.msra.mxu0 %v64
    %220 = vmatprep.subr.mxu0 0.0
    %221 = vmatpush1.msra.mxu0 %v63
    %222 = vmatprep.subr.mxu0 0.0
    %223 = vmatpush1.msra.mxu0 %v62
    %224 = vmatprep.subr.mxu0 0.0
    %225 = vmatpush1.msra.mxu0 %v61
    %226 = vmatprep.subr.mxu0 0.0
    %227 = vmatpush1.msra.mxu0 %v60
    %228 = vmatprep.subr.mxu0 0.0
    %229 = vmatpush1.msra.mxu0 %v59
    %230 = vmatprep.subr.mxu0 0.0
    %231 = vmatpush2.msra.mxu0 %v90
    %232 = vmatprep.subr.mxu0 0.0
    %233 = vmatpush2.msra.mxu0 %v89
    %234 = vmatprep.subr.mxu0 0.0
    %235 = vmatpush2.msra.mxu0 %v88
    %236 = vmatprep.subr.mxu0 0.0
    %237 = vmatpush2.msra.mxu0 %v87
    %238 = vmatprep.subr.mxu0 0.0
    %239 = vmatpush2.msra.mxu0 %v86
    %240 = vmatprep.subr.mxu0 0.0
    %241 = vmatpush2.msra.mxu0 %v85
    %242 = vmatprep.subr.mxu0 0.0
    %243 = vmatpush2.msra.mxu0 %v84
    %244 = vmatprep.subr.mxu0 0.0
    %245 = vmatpush2.msra.mxu0 %v83
    %246 = vmatprep.subr.mxu0 0.0
    %247 = vmatpush2.msra.mxu0 %v82
    %248 = vmatprep.subr.mxu0 0.0
    %249 = vmatpush2.msra.mxu0 %v81
    %250 = vmatprep.subr.mxu0 0.0
    %251 = vmatpush2.msra.mxu0 %v80
    %252 = vmatprep.subr.mxu0 0.0
    %253 = vmatpush2.msra.mxu0 %v79
    %254 = vmatprep.subr.mxu0 0.0
    %255 = vmatpush2.msra.mxu0 %v78
    %256 = vmatprep.subr.mxu0 0.0
    %257 = vmatpush2.msra.mxu0 %v77
    %258 = vmatprep.subr.mxu0 0.0
    %259 = vmatpush2.msra.mxu0 %v76
    %260 = vmatprep.subr.mxu0 0.0
    %261 = vmatpush2.msra.mxu0 %v75
    %262 = vmatprep.mubr.f32.mxu0 %v18
    %263 = vmatmul.mubr.f32.gmra.mxu0 %v17
    %v264 = vpop.f32.mrf.mxu0
    %v265 = vadd.f32 %v190, %v264
    %v266 = vpop.f32.mrf.mxu0
    %267 = vmatprep.mubr.f32.mxu0 %v24
    %268 = vmatmul.mubr.f32.gmra.mxu0 %v23
    %v269 = vpop.f32.mrf.mxu0
    %v270 = vadd.f32 %v195, %v269
    %v271 = vpop.f32.mrf.mxu0
    %272 = vdwg.mxu0
    %273 = vmatprep.subr.mxu0 0.0
    %274 = vmatpush1.msra.mxu0 %v106
    %275 = vmatprep.subr.mxu0 0.0
    %276 = vmatpush1.msra.mxu0 %v105
    %277 = vmatprep.subr.mxu0 0.0
    %278 = vmatpush1.msra.mxu0 %v104
    %279 = vmatprep.subr.mxu0 0.0
    %280 = vmatpush1.msra.mxu0 %v103
    %281 = vmatprep.subr.mxu0 0.0
    %282 = vmatpush1.msra.mxu0 %v102
    %283 = vmatprep.subr.mxu0 0.0
    %284 = vmatpush1.msra.mxu0 %v101
    %285 = vmatprep.subr.mxu0 0.0
    %286 = vmatpush1.msra.mxu0 %v100
    %287 = vmatprep.subr.mxu0 0.0
    %288 = vmatpush1.msra.mxu0 %v99
    %289 = vmatprep.subr.mxu0 0.0
    %290 = vmatpush1.msra.mxu0 %v98
    %291 = vmatprep.subr.mxu0 0.0
    %292 = vmatpush1.msra.mxu0 %v97
    %293 = vmatprep.subr.mxu0 0.0
    %294 = vmatpush1.msra.mxu0 %v96
    %295 = vmatprep.subr.mxu0 0.0
    %296 = vmatpush1.msra.mxu0 %v95
    %297 = vmatprep.subr.mxu0 0.0
    %298 = vmatpush1.msra.mxu0 %v94
    %299 = vmatprep.subr.mxu0 0.0
    %300 = vmatpush1.msra.mxu0 %v93
    %301 = vmatprep.subr.mxu0 0.0
    %302 = vmatpush1.msra.mxu0 %v92
    %303 = vmatprep.subr.mxu0 0.0
    %304 = vmatpush1.msra.mxu0 %v91
    %305 = vmatprep.subr.mxu0 0.0
    %306 = vmatpush2.msra.mxu0 %v122
    %307 = vmatprep.subr.mxu0 0.0
    %308 = vmatpush2.msra.mxu0 %v121
    %309 = vmatprep.subr.mxu0 0.0
    %310 = vmatpush2.msra.mxu0 %v120
    %311 = vmatprep.subr.mxu0 0.0
    %312 = vmatpush2.msra.mxu0 %v119
    %313 = vmatprep.subr.mxu0 0.0
    %314 = vmatpush2.msra.mxu0 %v118
    %315 = vmatprep.subr.mxu0 0.0
    %316 = vmatpush2.msra.mxu0 %v117
    %317 = vmatprep.subr.mxu0 0.0
    %318 = vmatpush2.msra.mxu0 %v116
    %319 = vmatprep.subr.mxu0 0.0
    %320 = vmatpush2.msra.mxu0 %v115
    %321 = vmatprep.subr.mxu0 0.0
    %322 = vmatpush2.msra.mxu0 %v114
    %323 = vmatprep.subr.mxu0 0.0
    %324 = vmatpush2.msra.mxu0 %v113
    %325 = vmatprep.subr.mxu0 0.0
    %326 = vmatpush2.msra.mxu0 %v112
    %327 = vmatprep.subr.mxu0 0.0
    %328 = vmatpush2.msra.mxu0 %v111
    %329 = vmatprep.subr.mxu0 0.0
    %330 = vmatpush2.msra.mxu0 %v110
    %331 = vmatprep.subr.mxu0 0.0
    %332 = vmatpush2.msra.mxu0 %v109
    %333 = vmatprep.subr.mxu0 0.0
    %334 = vmatpush2.msra.mxu0 %v108
    %335 = vmatprep.subr.mxu0 0.0
    %336 = vmatpush2.msra.mxu0 %v107
    %337 = vmatprep.mubr.f32.mxu0 %v20
    %338 = vmatmul.mubr.f32.gmra.mxu0 %v19
    %v339 = vpop.f32.mrf.mxu0
    %v340 = vadd.f32 %v265, %v339
    %v341 = vpop.f32.mrf.mxu0
    %342 = vmatprep.mubr.f32.mxu0 %v26
    %343 = vmatmul.mubr.f32.gmra.mxu0 %v25
    %v344 = vpop.f32.mrf.mxu0
    %v345 = vadd.f32 %v270, %v344
    %v346 = vpop.f32.mrf.mxu0
    %347 = vdwg.mxu0
    %v348 = vmax.f32 %v340, 0.0
    %v349 = vmax.f32 %v345, 0.0
    %v350 = vld [vmem:[%s2] sm:$0xff]
    %v351 = vld [vmem:[%s2 + $0x8] sm:$0xff]
    %v352 = vld [vmem:[%s2 + $0x10] sm:$0xff]
    %v353 = vld [vmem:[%s2 + $0x18] sm:$0xff]
    %v354 = vld [vmem:[%s2 + $0x20] sm:$0xff]
    %v355 = vld [vmem:[%s2 + $0x28] sm:$0xff]
    %vm356 = vcmask 64512
    %v358 = vsel %vm356, %v348, 0
    %v361 = vsel %vm356, %v349, 0
    %363 = vmatprep.subr.mxu0 0.0
    %364 = vmatpush1.msra.mxu0 0.0
    %365 = vmatprep.subr.mxu0 0.0
    %366 = vmatpush1.msra.mxu0 0.0
    %367 = vmatprep.subr.mxu0 0.0
    %368 = vmatpush1.msra.mxu0 0.0
    %369 = vmatprep.subr.mxu0 0.0
    %370 = vmatpush1.msra.mxu0 0.0
    %371 = vmatprep.subr.mxu0 0.0
    %372 = vmatpush1.msra.mxu0 0.0
    %373 = vmatprep.subr.mxu0 0.0
    %374 = vmatpush1.msra.mxu0 0.0
    %375 = vmatprep.subr.mxu0 0.0
    %376 = vmatpush1.msra.mxu0 0.0
    %377 = vmatprep.subr.mxu0 0.0
    %378 = vmatpush1.msra.mxu0 0.0
    %379 = vmatprep.subr.mxu0 0.0
    %380 = vmatpush1.msra.mxu0 0.0
    %381 = vmatprep.subr.mxu0 0.0
    %382 = vmatpush1.msra.mxu0 0.0
    %383 = vmatprep.subr.mxu0 0.0
    %384 = vmatpush1.msra.mxu0 0.0
    %385 = vmatprep.subr.mxu0 0.0
    %386 = vmatpush1.msra.mxu0 0.0
    %387 = vmatprep.subr.mxu0 0.0
    %388 = vmatpush1.msra.mxu0 0.0
    %389 = vmatprep.subr.mxu0 0.0
    %390 = vmatpush1.msra.mxu0 0.0
    %391 = vmatprep.subr.mxu0 0.0
    %392 = vmatpush1.msra.mxu0 0.0
    %393 = vmatprep.subr.mxu0 %v351
    %394 = vmatpush1.msra.mxu0 %v350
    %395 = vmatprep.subr.mxu0 0.0
    %396 = vmatpush2.msra.mxu0 0.0
    %397 = vmatprep.subr.mxu0 0.0
    %398 = vmatpush2.msra.mxu0 0.0
    %399 = vmatprep.subr.mxu0 0.0
    %400 = vmatpush2.msra.mxu0 0.0
    %401 = vmatprep.subr.mxu0 0.0
    %402 = vmatpush2.msra.mxu0 0.0
    %403 = vmatprep.subr.mxu0 0.0
    %404 = vmatpush2.msra.mxu0 0.0
    %405 = vmatprep.subr.mxu0 0.0
    %406 = vmatpush2.msra.mxu0 0.0
    %407 = vmatprep.subr.mxu0 0.0
    %408 = vmatpush2.msra.mxu0 0.0
    %409 = vmatprep.subr.mxu0 0.0
    %410 = vmatpush2.msra.mxu0 0.0
    %411 = vmatprep.subr.mxu0 0.0
    %412 = vmatpush2.msra.mxu0 0.0
    %413 = vmatprep.subr.mxu0 0.0
    %414 = vmatpush2.msra.mxu0 0.0
    %415 = vmatprep.subr.mxu0 0.0
    %416 = vmatpush2.msra.mxu0 0.0
    %417 = vmatprep.subr.mxu0 0.0
    %418 = vmatpush2.msra.mxu0 0.0
    %419 = vmatprep.subr.mxu0 0.0
    %420 = vmatpush2.msra.mxu0 0.0
    %421 = vmatprep.subr.mxu0 0.0
    %422 = vmatpush2.msra.mxu0 0.0
    %423 = vmatprep.subr.mxu0 0.0
    %424 = vmatpush2.msra.mxu0 0.0
    %425 = vmatprep.subr.mxu0 0.0
    %426 = vmatpush2.msra.mxu0 0.0
    %427 = vmatprep.mubr.f32.mxu0 0.0
    %428 = vmatmul.mubr.f32.gmra.mxu0 %v358
    %v429 = vpop.f32.mrf.mxu0
    %v430 = vadd.f32 0.0, %v429
    %v431 = vpop.f32.mrf.mxu0
    %v432 = vadd.f32 0.0, %v431
    %433 = vmatprep.mubr.f32.mxu0 0.0
    %434 = vmatmul.mubr.f32.gmra.mxu0 %v361
    %v435 = vpop.f32.mrf.mxu0
    %v436 = vadd.f32 0.0, %v435
    %v437 = vpop.f32.mrf.mxu0
    %v438 = vadd.f32 0.0, %v437
    %439 = vdwg.mxu0
    %440 = vmatprep.subr.mxu0 0.0
    %441 = vmatpush1.msra.mxu0 0.0
    %442 = vmatprep.subr.mxu0 0.0
    %443 = vmatpush1.msra.mxu0 0.0
    %444 = vmatprep.subr.mxu0 0.0
    %445 = vmatpush1.msra.mxu0 0.0
    %446 = vmatprep.subr.mxu0 0.0
    %447 = vmatpush1.msra.mxu0 0.0
    %448 = vmatprep.subr.mxu0 0.0
    %449 = vmatpush1.msra.mxu0 0.0
    %450 = vmatprep.subr.mxu0 0.0
    %451 = vmatpush1.msra.mxu0 0.0
    %452 = vmatprep.subr.mxu0 0.0
    %453 = vmatpush1.msra.mxu0 0.0
    %454 = vmatprep.subr.mxu0 0.0
    %455 = vmatpush1.msra.mxu0 0.0
    %456 = vmatprep.subr.mxu0 0.0
    %457 = vmatpush1.msra.mxu0 0.0
    %458 = vmatprep.subr.mxu0 0.0
    %459 = vmatpush1.msra.mxu0 0.0
    %460 = vmatprep.subr.mxu0 0.0
    %461 = vmatpush1.msra.mxu0 0.0
    %462 = vmatprep.subr.mxu0 0.0
    %463 = vmatpush1.msra.mxu0 0.0
    %464 = vmatprep.subr.mxu0 0.0
    %465 = vmatpush1.msra.mxu0 0.0
    %466 = vmatprep.subr.mxu0 0.0
    %467 = vmatpush1.msra.mxu0 0.0
    %468 = vmatprep.subr.mxu0 0.0
    %469 = vmatpush1.msra.mxu0 0.0
    %470 = vmatprep.subr.mxu0 %v353
    %471 = vmatpush1.msra.mxu0 %v352
    %472 = vmatprep.subr.mxu0 0.0
    %473 = vmatpush2.msra.mxu0 0.0
    %474 = vmatprep.subr.mxu0 0.0
    %475 = vmatpush2.msra.mxu0 0.0
    %476 = vmatprep.subr.mxu0 0.0
    %477 = vmatpush2.msra.mxu0 0.0
    %478 = vmatprep.subr.mxu0 0.0
    %479 = vmatpush2.msra.mxu0 0.0
    %480 = vmatprep.subr.mxu0 0.0
    %481 = vmatpush2.msra.mxu0 0.0
    %482 = vmatprep.subr.mxu0 0.0
    %483 = vmatpush2.msra.mxu0 0.0
    %484 = vmatprep.subr.mxu0 0.0
    %485 = vmatpush2.msra.mxu0 0.0
    %486 = vmatprep.subr.mxu0 0.0
    %487 = vmatpush2.msra.mxu0 0.0
    %488 = vmatprep.subr.mxu0 0.0
    %489 = vmatpush2.msra.mxu0 0.0
    %490 = vmatprep.subr.mxu0 0.0
    %491 = vmatpush2.msra.mxu0 0.0
    %492 = vmatprep.subr.mxu0 0.0
    %493 = vmatpush2.msra.mxu0 0.0
    %494 = vmatprep.subr.mxu0 0.0
    %495 = vmatpush2.msra.mxu0 0.0
    %496 = vmatprep.subr.mxu0 0.0
    %497 = vmatpush2.msra.mxu0 0.0
    %498 = vmatprep.subr.mxu0 0.0
    %499 = vmatpush2.msra.mxu0 0.0
    %500 = vmatprep.subr.mxu0 0.0
    %501 = vmatpush2.msra.mxu0 0.0
    %502 = vmatprep.subr.mxu0 0.0
    %503 = vmatpush2.msra.mxu0 0.0
    %504 = vmatprep.mubr.f32.mxu0 0.0
    %505 = vmatmul.mubr.f32.gmra.mxu0 %v358
    %v506 = vpop.f32.mrf.mxu0
    %v507 = vadd.f32 0.0, %v506
    %v508 = vpop.f32.mrf.mxu0
    %v509 = vadd.f32 0.0, %v508
    %510 = vmatprep.mubr.f32.mxu0 0.0
    %511 = vmatmul.mubr.f32.gmra.mxu0 %v361
    %v512 = vpop.f32.mrf.mxu0
    %v513 = vadd.f32 0.0, %v512
    %v514 = vpop.f32.mrf.mxu0
    %v515 = vadd.f32 0.0, %v514
    %516 = vdwg.mxu0
    %517 = vmatprep.subr.mxu0 0.0
    %518 = vmatpush1.msra.mxu0 0.0
    %519 = vmatprep.subr.mxu0 0.0
    %520 = vmatpush1.msra.mxu0 0.0
    %521 = vmatprep.subr.mxu0 0.0
    %522 = vmatpush1.msra.mxu0 0.0
    %523 = vmatprep.subr.mxu0 0.0
    %524 = vmatpush1.msra.mxu0 0.0
    %525 = vmatprep.subr.mxu0 0.0
    %526 = vmatpush1.msra.mxu0 0.0
    %527 = vmatprep.subr.mxu0 0.0
    %528 = vmatpush1.msra.mxu0 0.0
    %529 = vmatprep.subr.mxu0 0.0
    %530 = vmatpush1.msra.mxu0 0.0
    %531 = vmatprep.subr.mxu0 0.0
    %532 = vmatpush1.msra.mxu0 0.0
    %533 = vmatprep.subr.mxu0 0.0
    %534 = vmatpush1.msra.mxu0 0.0
    %535 = vmatprep.subr.mxu0 0.0
    %536 = vmatpush1.msra.mxu0 0.0
    %537 = vmatprep.subr.mxu0 0.0
    %538 = vmatpush1.msra.mxu0 0.0
    %539 = vmatprep.subr.mxu0 0.0
    %540 = vmatpush1.msra.mxu0 0.0
    %541 = vmatprep.subr.mxu0 0.0
    %542 = vmatpush1.msra.mxu0 0.0
    %543 = vmatprep.subr.mxu0 0.0
    %544 = vmatpush1.msra.mxu0 0.0
    %545 = vmatprep.subr.mxu0 0.0
    %546 = vmatpush1.msra.mxu0 0.0
    %547 = vmatprep.subr.mxu0 %v355
    %548 = vmatpush1.msra.mxu0 %v354
    %549 = vmatprep.subr.mxu0 0.0
    %550 = vmatpush2.msra.mxu0 0.0
    %551 = vmatprep.subr.mxu0 0.0
    %552 = vmatpush2.msra.mxu0 0.0
    %553 = vmatprep.subr.mxu0 0.0
    %554 = vmatpush2.msra.mxu0 0.0
    %555 = vmatprep.subr.mxu0 0.0
    %556 = vmatpush2.msra.mxu0 0.0
    %557 = vmatprep.subr.mxu0 0.0
    %558 = vmatpush2.msra.mxu0 0.0
    %559 = vmatprep.subr.mxu0 0.0
    %560 = vmatpush2.msra.mxu0 0.0
    %561 = vmatprep.subr.mxu0 0.0
    %562 = vmatpush2.msra.mxu0 0.0
    %563 = vmatprep.subr.mxu0 0.0
    %564 = vmatpush2.msra.mxu0 0.0
    %565 = vmatprep.subr.mxu0 0.0
    %566 = vmatpush2.msra.mxu0 0.0
    %567 = vmatprep.subr.mxu0 0.0
    %568 = vmatpush2.msra.mxu0 0.0
    %569 = vmatprep.subr.mxu0 0.0
    %570 = vmatpush2.msra.mxu0 0.0
    %571 = vmatprep.subr.mxu0 0.0
    %572 = vmatpush2.msra.mxu0 0.0
    %573 = vmatprep.subr.mxu0 0.0
    %574 = vmatpush2.msra.mxu0 0.0
    %575 = vmatprep.subr.mxu0 0.0
    %576 = vmatpush2.msra.mxu0 0.0
    %577 = vmatprep.subr.mxu0 0.0
    %578 = vmatpush2.msra.mxu0 0.0
    %579 = vmatprep.subr.mxu0 0.0
    %580 = vmatpush2.msra.mxu0 0.0
    %581 = vmatprep.mubr.f32.mxu0 0.0
    %582 = vmatmul.mubr.f32.gmra.mxu0 %v358
    %v583 = vpop.f32.mrf.mxu0
    %v584 = vadd.f32 0.0, %v583
    %v585 = vpop.f32.mrf.mxu0
    %v586 = vadd.f32 0.0, %v585
    %587 = vmatprep.mubr.f32.mxu0 0.0
    %588 = vmatmul.mubr.f32.gmra.mxu0 %v361
    %v589 = vpop.f32.mrf.mxu0
    %v590 = vadd.f32 0.0, %v589
    %v591 = vpop.f32.mrf.mxu0
    %v592 = vadd.f32 0.0, %v591
    %593 = vdwg.mxu0
    %v594 = vxor.u32 %v430, 2147483648
    %v595 = vxor.u32 %v432, 2147483648
    %v596 = vxor.u32 %v507, 2147483648
    %v597 = vxor.u32 %v509, 2147483648
    %v598 = vxor.u32 %v584, 2147483648
    %v599 = vxor.u32 %v586, 2147483648
    %v600 = vxor.u32 %v436, 2147483648
    %v601 = vxor.u32 %v438, 2147483648
    %v602 = vxor.u32 %v513, 2147483648
    %v603 = vxor.u32 %v515, 2147483648
    %v604 = vxor.u32 %v590, 2147483648
    %v605 = vxor.u32 %v592, 2147483648
    %v606 = vmul.f32 %v594, 1.442695
    %v607 = vpow.pop %v606
    %v608 = vmul.f32 %v595, 1.442695
    %v609 = vpow.pop %v608
    %v610 = vmul.f32 %v596, 1.442695
    %v611 = vpow.pop %v610
    %v612 = vmul.f32 %v597, 1.442695
    %v613 = vpow.pop %v612
    %v614 = vmul.f32 %v598, 1.442695
    %v615 = vpow.pop %v614
    %v616 = vmul.f32 %v599, 1.442695
    %v617 = vpow.pop %v616
    %v618 = vmul.f32 %v600, 1.442695
    %v619 = vpow.pop %v618
    %v620 = vmul.f32 %v601, 1.442695
    %v621 = vpow.pop %v620
    %v622 = vmul.f32 %v602, 1.442695
    %v623 = vpow.pop %v622
    %v624 = vmul.f32 %v603, 1.442695
    %v625 = vpow.pop %v624
    %v626 = vmul.f32 %v604, 1.442695
    %v627 = vpow.pop %v626
    %v628 = vmul.f32 %v605, 1.442695
    %v629 = vpow.pop %v628
    %v630 = vadd.f32 %v607, 1.0
    %v631 = vadd.f32 %v609, 1.0
    %v632 = vadd.f32 %v611, 1.0
    %v633 = vadd.f32 %v613, 1.0
    %v634 = vadd.f32 %v615, 1.0
    %v635 = vadd.f32 %v617, 1.0
    %v636 = vadd.f32 %v619, 1.0
    %v637 = vadd.f32 %v621, 1.0
    %v638 = vadd.f32 %v623, 1.0
    %v639 = vadd.f32 %v625, 1.0
    %v640 = vadd.f32 %v627, 1.0
    %v641 = vadd.f32 %v629, 1.0
    %v642 = vrcp.pop %v630
    %v643 = vmul.f32 1.0, %v642
    %v644 = vrcp.pop %v631
    %v645 = vmul.f32 1.0, %v644
    %v646 = vrcp.pop %v632
    %v647 = vmul.f32 1.0, %v646
    %v648 = vrcp.pop %v633
    %v649 = vmul.f32 1.0, %v648
    %v650 = vrcp.pop %v634
    %v651 = vmul.f32 1.0, %v650
    %v652 = vrcp.pop %v635
    %v653 = vmul.f32 1.0, %v652
    %v654 = vrcp.pop %v636
    %v655 = vmul.f32 1.0, %v654
    %v656 = vrcp.pop %v637
    %v657 = vmul.f32 1.0, %v656
    %v658 = vrcp.pop %v638
    %v659 = vmul.f32 1.0, %v658
    %v660 = vrcp.pop %v639
    %v661 = vmul.f32 1.0, %v660
    %v662 = vrcp.pop %v640
    %v663 = vmul.f32 1.0, %v662
    %v664 = vrcp.pop %v641
    %v665 = vmul.f32 1.0, %v664
    %v666 = vmul.f32 %v15, %v643
    %v667 = vmul.f32 %v16, %v645
    %v668 = vmul.f32 %v17, %v647
    %v669 = vmul.f32 %v18, %v649
    %v670 = vmul.f32 %v19, %v651
    %v671 = vmul.f32 %v20, %v653
    %v672 = vmul.f32 %v21, %v655
    %v673 = vmul.f32 %v22, %v657
    %v674 = vmul.f32 %v23, %v659
    %v675 = vmul.f32 %v24, %v661
    %v676 = vmul.f32 %v25, %v663
    %v677 = vmul.f32 %v26, %v665
    %678 = vst [vmem:[#allocation2] sm:$0xff] %v666
    %679 = vst [vmem:[#allocation2 + $0x8] sm:$0xff] %v667
    %680 = vst [vmem:[#allocation2 + $0x10] sm:$0xff] %v668
    %681 = vst [vmem:[#allocation2 + $0x18] sm:$0xff] %v669
    %682 = vst [vmem:[#allocation2 + $0x20] sm:$0xff] %v670
    %683 = vst [vmem:[#allocation2 + $0x28] sm:$0xff] %v671
    %684 = vst [vmem:[#allocation2 + $0x30] sm:$0xff] %v672
    %685 = vst [vmem:[#allocation2 + $0x38] sm:$0xff] %v673
    %686 = vst [vmem:[#allocation2 + $0x40] sm:$0xff] %v674
    %687 = vst [vmem:[#allocation2 + $0x48] sm:$0xff] %v675
    %688 = vst [vmem:[#allocation2 + $0x50] sm:$0xff] %v676
    %689 = vst [vmem:[#allocation2 + $0x58] sm:$0xff] %v677
    // Predicated region
    $region14: #{tpu_custom_call.1} parent=1 // pred_check
      _
    $region15: #{tpu_custom_call.1} parent=1 // pred_check_branch
      %691 = sbr.rel (0) target = $region17
    $region16: #{tpu_custom_call.1} parent=1 // pred_region
      %s693 = ssub.s32 1536, 1536
      %694 = vsyncadd [#allocation3], %s693
      %s695 = sshll.u32 [#allocation2], 4
      %s696 = int_to_ptr.vmem [resolvable:$true] %s695
      %701 = dma.vmem_to_hbm [thread:$0]  %s696, 1536, %s3, [#allocation3], 768, 768, 48
    $region17: #{tpu_custom_call.1} parent=1 // pred_fallthru
      _
    // Predicated region
    $region18: #{tpu_custom_call.1} parent=1 // pred_check
      _
    $region19: #{tpu_custom_call.1} parent=1 // pred_check_branch
      %703 = sbr.rel (0) target = $region21
    $region20: #{tpu_custom_call.1} parent=1 // pred_region
      %704 = dma.done [#allocation3], 1536
    $region21: #{tpu_custom_call.1} parent=1 // pred_fallthru
      _
    %705 = vsyncpa [#allocation3], 1

</llo_original>
